<compile_context>
chip_gen: v5e
topology: v5e:2x2
jax: 0.10.0
libtpu: 0.0.40
codegen_flags: <defaults>
</compile_context>

<pallas_src>
import jax
import jax.numpy as jnp
from jax import lax
from jax.experimental import pallas as pl
from jax.experimental.pallas import tpu as pltpu


def _round_up(x, m):
    return (x + m - 1) // m * m


# Conservative per-kernel VMEM footprint budget (fits v5e/v6e/v7x with the explicit
# 32 MiB scoped limit below, leaving headroom for compiler temporaries).
_VMEM_BUDGET_BYTES = 20 << 20


def _gather_kernel(seq_ref, table_ref, out_ref):
    """Fused multi-topic (+shared) embedding gather as a one-hot matmul.

    grid = (n_bl, n_v): BL tiles are "parallel" (megacore), vocab chunks are
    "arbitrary" (reduction, last axis).  The output block is resident across the
    vocab axis and doubles as the accumulator (no separate scratch).
    """
    v = pl.program_id(1)
    v_chunk = table_ref.shape[0]

    # Shift the small (1, BLt) id row, not the (Vc, BLt) iota.
    ids = seq_ref[...] - v * v_chunk                                   # (1, BLt)
    vc_iota = lax.broadcasted_iota(jnp.int32, (v_chunk, ids.shape[-1]), 0)
    onehot = (vc_iota == ids).astype(table_ref.dtype)                  # (Vc, BLt)

    @pl.when(v == 0)
    def _():
        out_ref[...] = jnp.zeros_like(out_ref)

    # (Fc, BLt) += table_chunk^T @ onehot.  Exactly one nonzero per column => row copy.
    # HIGHEST precision keeps f32 table values bit-exact through the MXU.
    out_ref[...] += lax.dot_general(
        table_ref[...], onehot,
        dimension_numbers=(((0,), (0,)), ((), ())),
        preferred_element_type=jnp.float32,
        precision=lax.Precision.HIGHEST)


def _pick_tiles(V, BL, Fc, v_chunk, bl_tile):
    """Choose (v_chunk, bl_tile): lane-dense, sublane-aligned, under the VMEM budget."""
    if bl_tile is None:
        bl_tile = 1024
    if v_chunk is None:
        v_chunk = 512
    bl_tile = min(_round_up(bl_tile, 128), _round_up(BL, 128))
    v_chunk = min(_round_up(v_chunk, 8), _round_up(V, 8))

    def footprint(vc, blt):
        # 2x-buffered table block + 2x output block + one-hot intermediate + seq block.
        return 4 * (2 * vc * Fc + 2 * Fc * blt + vc * blt + 2 * blt)

    while footprint(v_chunk, bl_tile) > _VMEM_BUDGET_BYTES and bl_tile > 128:
        bl_tile = max(128, _round_up(bl_tile // 2, 128))
    while footprint(v_chunk, bl_tile) > _VMEM_BUDGET_BYTES and v_chunk > 8:
        v_chunk = max(8, _round_up(v_chunk // 2, 8))
    return v_chunk, bl_tile


def topic_layer_forward(sequence, topic_tables, shared_table=None, *,
                        v_chunk=None, bl_tile=None):
    """TopicLayer forward.

    Args:
      sequence:     (B, L) int32 token ids.
      topic_tables: (T, V, Ft) f32 stacked per-topic embedding weights.
      shared_table: (V, Fs) f32 shared embedding weight, or None.
    Returns:
      (T, B, Ft+Fs, L) f32; out[t] equals PyTorch's topics[t].
    """
    T, V, Ft = topic_tables.shape
    B, L = sequence.shape
    BL = B * L
    Fs = 0 if shared_table is None else shared_table.shape[1]
    Fc = T * Ft + Fs   # fused MXU N dimension: all topics (+ shared) gathered at once

    # ---- wrapper-side layout plumbing (pure reshape/transpose, no compute) -----------
    combined = jnp.transpose(topic_tables, (1, 0, 2)).reshape(V, T * Ft)
    if shared_table is not None:
        combined = jnp.concatenate([combined, shared_table.reshape(V, Fs)], axis=1)
    combined = combined.astype(jnp.float32)                            # (V, Fc)

    v_chunk, bl_tile = _pick_tiles(V, BL, Fc, v_chunk, bl_tile)
    V_pad = _round_up(V, v_chunk)    # zero rows: never matched since ids < V
    BL_pad = _round_up(BL, bl_tile)  # padded columns gather row 0; sliced off below

    seq_flat = sequence.reshape(1, BL).astype(jnp.int32)
    if BL_pad != BL:
        seq_flat = jnp.pad(seq_flat, ((0, 0), (0, BL_pad - BL)))
    if V_pad != V:
        combined = jnp.pad(combined, ((0, V_pad - V), (0, 0)))

    n_bl = BL_pad // bl_tile
    n_v = V_pad // v_chunk

    out = pl.pallas_call(
        _gather_kernel,
        out_shape=jax.ShapeDtypeStruct((Fc, BL_pad), jnp.float32),
        grid_spec=pltpu.PrefetchScalarGridSpec(
            num_scalar_prefetch=0,
            grid=(n_bl, n_v),
            in_specs=[pl.BlockSpec((1, bl_tile), lambda b, v: (0, b)),
                      pl.BlockSpec((v_chunk, Fc), lambda b, v: (v, 0))],
            out_specs=pl.BlockSpec((Fc, bl_tile), lambda b, v: (0, b))),
        compiler_params=pltpu.CompilerParams(
            dimension_semantics=("parallel", "arbitrary"),
            vmem_limit_bytes=32 << 20),
    )(seq_flat, combined)                                              # (Fc, BL_pad)

    # ---- back to the PyTorch layout: (T, B, Ft+Fs, L) ---------------------------------
    out = out[:, :BL]
    topic_part = out[:T * Ft].reshape(T, Ft, B, L)
    if Fs:
        shared_part = jnp.broadcast_to(out[T * Ft:].reshape(1, Fs, B, L),
                                       (T, Fs, B, L))
        full = jnp.concatenate([topic_part, shared_part], axis=1)      # (T, Fout, B, L)
    else:
        full = topic_part
    return jnp.transpose(full, (0, 2, 1, 3))                           # (T, B, Fout, L)


def _reference(sequence, topic_tables, shared_table):
    outs = []
    for t in range(topic_tables.shape[0]):
        e = jnp.take(topic_tables[t], sequence, axis=0)                # (B, L, Ft)
        e = jnp.transpose(e, (0, 2, 1))                                # (B, Ft, L)
        if shared_table is not None:
            s = jnp.transpose(jnp.take(shared_table, sequence, axis=0), (0, 2, 1))
            e = jnp.concatenate([e, s], axis=1)
        outs.append(e)
    return jnp.stack(outs, axis=0)                                     # (T, B, Fout, L)


if __name__ == "__main__":
    # Module hyperparameters (small synthetic sizes).
    vocab_size = 32
    num_topics = 3
    num_topic_filters = 16
    num_shared_filters = 8
    B, L = 2, 8

    key = jax.random.PRNGKey(0)
    k_topic, k_shared, k_seq = jax.random.split(key, 3)

    topic_tables = jax.random.normal(
        k_topic, (num_topics, vocab_size, num_topic_filters), dtype=jnp.float32)
    shared_table = jax.random.normal(
        k_shared, (vocab_size, num_shared_filters), dtype=jnp.float32)
    sequence = jax.random.randint(k_seq, (B, L), 0, vocab_size, dtype=jnp.int32)

    out = jax.block_until_ready(topic_layer_forward(sequence, topic_tables, shared_table))
    ref = _reference(sequence, topic_tables, shared_table)
    assert out.shape == (num_topics, B, num_topic_filters + num_shared_filters, L), out.shape
    assert jnp.allclose(out, ref, atol=1e-5), "mismatch vs reference (shared path)"

    # Also exercise the num_shared_filters == 0 path.
    out_ns = jax.block_until_ready(topic_layer_forward(sequence, topic_tables, None))
    ref_ns = _reference(sequence, topic_tables, None)
    assert jnp.allclose(out_ns, ref_ns, atol=1e-5), "mismatch vs reference (no shared)"

    print("KERNEL_OK")
</pallas_src>

<mosaic_0001>
module attributes {stable_mosaic.version = 11 : i64} {
  func.func @_gather_kernel(%arg0: i32, %arg1: i32, %arg2: memref<1x128xi32, #tpu.memory_space<vmem>>, %arg3: memref<32x56xf32, #tpu.memory_space<vmem>>, %arg4: memref<56x128xf32, #tpu.memory_space<vmem>>) attributes {dimension_semantics = [#tpu.dimension_semantics<parallel>, #tpu.dimension_semantics<arbitrary>], iteration_bounds = array<i64: 1, 1>, scalar_prefetch = 0 : i64, scratch_operands = 0 : i64, tpu.core_type = #tpu.core_type<tc>, window_params = [{transform_indices = @transform_0, window_bounds = array<i64: 1, 128>}, {transform_indices = @transform_1, window_bounds = array<i64: 32, 56>}, {transform_indices = @transform_2, window_bounds = array<i64: 56, 128>}]} {
    %c0 = arith.constant 0 : index
    %c0_0 = arith.constant 0 : index
    %0 = vector.load %arg2[%c0, %c0_0] : memref<1x128xi32, #tpu.memory_space<vmem>>, vector<1x128xi32>
    %c32_i32 = arith.constant 32 : i32
    %1 = arith.muli %arg1, %c32_i32 : i32
    %2 = vector.broadcast %1 : i32 to vector<1x128xi32>
    %3 = arith.subi %0, %2 : vector<1x128xi32>
    %4 = tpu.iota {dimensions = array<i32: 0>} : vector<32x128xi32>
    %5 = vector.broadcast %3 : vector<1x128xi32> to vector<32x128xi32>
    %6 = arith.cmpi eq, %4, %5 : vector<32x128xi32>
    %7 = arith.extui %6 : vector<32x128xi1> to vector<32x128xi32>
    %8 = arith.sitofp %7 : vector<32x128xi32> to vector<32x128xf32>
    %c0_i32 = arith.constant 0 : i32
    %9 = arith.cmpi eq, %arg1, %c0_i32 : i32
    %10 = arith.extui %9 : i1 to i32
    %c0_i32_1 = arith.constant 0 : i32
    %11 = arith.cmpi ne, %10, %c0_i32_1 : i32
    scf.if %11 {
      %cst_8 = arith.constant 0.000000e+00 : f32
      %17 = vector.broadcast %cst_8 : f32 to vector<56x128xf32>
      %c0_9 = arith.constant 0 : index
      %c0_10 = arith.constant 0 : index
      %18 = vector.load %arg4[%c0_9, %c0_10] : memref<56x128xf32, #tpu.memory_space<vmem>>, vector<56x128xf32>
      tpu.vector_store %arg4[%c0_9, %c0_10], %17 {strides = array<i32>} : memref<56x128xf32, #tpu.memory_space<vmem>>, vector<56x128xf32>,
    } else {
    }
    %c0_2 = arith.constant 0 : index
    %c0_3 = arith.constant 0 : index
    %12 = vector.load %arg4[%c0_2, %c0_3] : memref<56x128xf32, #tpu.memory_space<vmem>>, vector<56x128xf32>
    %c0_4 = arith.constant 0 : index
    %c0_5 = arith.constant 0 : index
    %13 = vector.load %arg3[%c0_4, %c0_5] : memref<32x56xf32, #tpu.memory_space<vmem>>, vector<32x56xf32>
    %cst = arith.constant dense<0.000000e+00> : vector<56x128xf32>
    %14 = tpu.matmul %13, %8, %cst {dimension_numbers = #tpu.dot_dimension_numbers<[0], [0], [1], [1], [0, 1, 1, 1], [], []>, precision = #tpu.contract_precision<fp32>} : vector<32x56xf32>, vector<32x128xf32>, vector<56x128xf32> -> vector<56x128xf32>
    %15 = arith.addf %12, %14 : vector<56x128xf32>
    %c0_6 = arith.constant 0 : index
    %c0_7 = arith.constant 0 : index
    %16 = vector.load %arg4[%c0_6, %c0_7] : memref<56x128xf32, #tpu.memory_space<vmem>>, vector<56x128xf32>
    tpu.vector_store %arg4[%c0_6, %c0_7], %15 {strides = array<i32>} : memref<56x128xf32, #tpu.memory_space<vmem>>, vector<56x128xf32>,
    return
  }
  func.func @transform_0(%arg0: i32, %arg1: i32) -> (i32, i32) {
    %c0_i32 = arith.constant 0 : i32
    %c0_i32_0 = arith.constant 0 : i32
    return %c0_i32, %arg0 : i32, i32
  }
  func.func @transform_1(%arg0: i32, %arg1: i32) -> (i32, i32) {
    %c0_i32 = arith.constant 0 : i32
    %c0_i32_0 = arith.constant 0 : i32
    return %arg1, %c0_i32 : i32, i32
  }
  func.func @transform_2(%arg0: i32, %arg1: i32) -> (i32, i32) {
    %c0_i32 = arith.constant 0 : i32
    %c0_i32_0 = arith.constant 0 : i32
    return %c0_i32, %arg0 : i32, i32
  }
}

</mosaic_0001>

<llo_original>
// kernel: tpu_custom_call.1
$region0: #{tpu_custom_call.1}
  #allocation0 [shape = 'u32[]', space=smem, size = 0x4, offset = 0x4, fixed_abs, tag = 'smem constant byte address 0x4 - core index']
  #allocation1 [shape = 'u32[72,128]{1,0:T(1,128)}', space=vmem, size = 0x9000, scoped, tag = 'internal scratch']
  %s0 = inlined_call_operand.hbm [shape: s32[1,128], index: 0, kind: input, shape index: {}]
  %s1 = inlined_call_operand.hbm [shape: f32[32,56], index: 1, kind: input, shape index: {}]
  %s2 = inlined_call_operand.hbm [shape: f32[56,128], index: 2, kind: output, shape index: {}]
  %s3 = sld [smem:[#allocation0]]
  $region30: #{tpu_custom_call.1} parent=0
    _
  %s5 = ssub.s32 1, %s3
  %s6 = scalar_select 0, %s5, %s3
  $region1: #{tpu_custom_call.1} parent=0
    #allocation2 [shape = 'u8[512]{0}', space=vmem, size = 0x400, scoped, tag = 'input window, operand 0, single buffered']
    #allocation3 [shape = 's32[1]{0}', space=sflag, size = 0x4, scoped, tag = 'scoped memory for tpu_custom_call.1']
    #allocation4 [shape = 's32[1]{0}', space=sflag, size = 0x4, scoped, tag = 'scoped memory for tpu_custom_call.1']
    #allocation5 [shape = 'u8[16384]{0}', space=vmem, size = 0x4000, scoped, tag = 'input window, operand 1, single buffered']
    #allocation6 [shape = 's32[1]{0}', space=sflag, size = 0x4, scoped, tag = 'scoped memory for tpu_custom_call.1']
    #allocation7 [shape = 'u8[28672]{0}', space=vmem, size = 0x7000, scoped, tag = 'output window, operand 0, single buffered']
    %7 = vsyncpa [#allocation3], 0
    %8 = vsyncpa [#allocation6], 0
    %9 = vsyncpa [#allocation4], 0
    // Predicated region
    $region2: #{tpu_custom_call.1} parent=1 // pred_check
      _
    $region3: #{tpu_custom_call.1} parent=1 // pred_check_branch
      %11 = sbr.rel (0) target = $region5
    $region4: #{tpu_custom_call.1} parent=1 // pred_region
      %13 = vsyncadd [#allocation3], 0
      %s15 = sshll.u32 %s0, 4
      %s16 = int_to_ptr.hbm [resolvable:$true] %s15
      %s17 = sshll.u32 [#allocation2], 4
      %s18 = int_to_ptr.vmem [resolvable:$true] %s17
      %20 = dma.hbm_to_vmem [thread:$0]  %s16, 16, %s18, [#allocation3]
    $region5: #{tpu_custom_call.1} parent=1 // pred_fallthru
      _
    // Predicated region
    $region6: #{tpu_custom_call.1} parent=1 // pred_check
      _
    $region7: #{tpu_custom_call.1} parent=1 // pred_check_branch
      %22 = sbr.rel (0) target = $region9
    $region8: #{tpu_custom_call.1} parent=1 // pred_region
      %24 = vsyncadd [#allocation6], 0
      %s25 = sshll.u32 %s1, 4
      %s26 = int_to_ptr.hbm [resolvable:$true] %s25
      %s27 = sshll.u32 [#allocation5], 4
      %s28 = int_to_ptr.vmem [resolvable:$true] %s27
      %33 = dma.hbm_to_vmem [thread:$0]  %s26, 512, %s28, [#allocation6], 128, 128, 8
    $region9: #{tpu_custom_call.1} parent=1 // pred_fallthru
      _
    // Predicated region
    $region10: #{tpu_custom_call.1} parent=1 // pred_check
      _
    $region11: #{tpu_custom_call.1} parent=1 // pred_check_branch
      %35 = sbr.rel (0) target = $region13
    $region12: #{tpu_custom_call.1} parent=1 // pred_region
      %37 = dma.done [#allocation3], 16
    $region13: #{tpu_custom_call.1} parent=1 // pred_fallthru
      _
    // Predicated region
    $region14: #{tpu_custom_call.1} parent=1 // pred_check
      _
    $region15: #{tpu_custom_call.1} parent=1 // pred_check_branch
      %39 = sbr.rel (0) target = $region17
    $region16: #{tpu_custom_call.1} parent=1 // pred_region
      %41 = dma.done [#allocation6], 512
    $region17: #{tpu_custom_call.1} parent=1 // pred_fallthru
      _
    %v42 = vld [vmem:[#allocation2] sm:$0x1]
    %s43 = smul.u32 0, 32
    %v44 = vstv %s43
    %v45 = vsub.s32 %v42, %v44
    %v46 = vlaneseq
    %v47 = vshrl.u32 %v46, 7
    %v48 = vadd.s32 %v47, 8
    %v49 = vadd.s32 %v47, 16
    %v50 = vadd.s32 %v47, 24
    %v51 = vperm.slane %v45, 0
    %vm52 = vcmp.eq.s32.totalorder %v47, %v51
    %vm53 = vcmp.eq.s32.totalorder %v48, %v51
    %vm54 = vcmp.eq.s32.totalorder %v49, %v51
    %vm55 = vcmp.eq.s32.totalorder %v50, %v51
    %v56 = vsel %vm52, 1, 0
    %v57 = vsel %vm53, 1, 0
    %v58 = vsel %vm54, 1, 0
    %v59 = vsel %vm55, 1, 0
    %v60 = vcvt.s32.f32 %v56
    %v61 = vcvt.s32.f32 %v57
    %v62 = vcvt.s32.f32 %v58
    %v63 = vcvt.s32.f32 %v59
    %p64 = scmp.eq.s32.totalorder 0, 0
    // Predicated region
    $region18: #{tpu_custom_call.1} parent=1 // pred_check
      %p65 = pneg %p64
    $region19: #{tpu_custom_call.1} parent=1 // pred_check_branch
      %67 = sbr.rel (%p65) target = $region21
    $region20: #{tpu_custom_call.1} parent=1 // pred_region
      %68 = vst [vmem:[#allocation7] sm:$0xff] 0.0
      %69 = vst [vmem:[#allocation7 + $0x8] sm:$0xff] 0.0
      %70 = vst [vmem:[#allocation7 + $0x10] sm:$0xff] 0.0
      %71 = vst [vmem:[#allocation7 + $0x18] sm:$0xff] 0.0
      %72 = vst [vmem:[#allocation7 + $0x20] sm:$0xff] 0.0
      %73 = vst [vmem:[#allocation7 + $0x28] sm:$0xff] 0.0
      %74 = vst [vmem:[#allocation7 + $0x30] sm:$0xff] 0.0
    $region21: #{tpu_custom_call.1} parent=1 // pred_fallthru
      _
    %v75 = vld [vmem:[#allocation7] sm:$0xff]
    %v76 = vld [vmem:[#allocation7 + $0x8] sm:$0xff]
    %v77 = vld [vmem:[#allocation7 + $0x10] sm:$0xff]
    %v78 = vld [vmem:[#allocation7 + $0x18] sm:$0xff]
    %v79 = vld [vmem:[#allocation7 + $0x20] sm:$0xff]
    %v80 = vld [vmem:[#allocation7 + $0x28] sm:$0xff]
    %v81 = vld [vmem:[#allocation7 + $0x30] sm:$0xff]
    %v82 = vld [vmem:[#allocation5] sm:$0xff]
    %v83 = vld [vmem:[#allocation5 + $0x8] sm:$0xff]
    %v84 = vld [vmem:[#allocation5 + $0x10] sm:$0xff]
    %v85 = vld [vmem:[#allocation5 + $0x18] sm:$0xff]
    %86 = vxpose.xlu0.b32.start [1/16] %v82, 128
    %87 = vxpose.xlu0.b32.cont [2/16] %v83, 128
    %88 = vxpose.xlu0.b32.cont [3/16] %v84, 128
    %89 = vxpose.xlu0.b32.cont [4/16] %v85, 128
    %90 = vxpose.xlu0.b32.cont [5/16] 0.0, 128
    %91 = vxpose.xlu0.b32.cont [6/16] 0.0, 128
    %92 = vxpose.xlu0.b32.cont [7/16] 0.0, 128
    %93 = vxpose.xlu0.b32.cont [8/16] 0.0, 128
    %94 = vxpose.xlu0.b32.cont [9/16] 0.0, 128
    %95 = vxpose.xlu0.b32.cont [10/16] 0.0, 128
    %96 = vxpose.xlu0.b32.cont [11/16] 0.0, 128
    %97 = vxpose.xlu0.b32.cont [12/16] 0.0, 128
    %98 = vxpose.xlu0.b32.cont [13/16] 0.0, 128
    %99 = vxpose.xlu0.b32.cont [14/16] 0.0, 128
    %100 = vxpose.xlu0.b32.cont [15/16] 0.0, 128
    %101 = vxpose.xlu0.b32.end [16/16] 0.0, 128
    %v102 = vpop.trf.xlu0
    %v103 = vpop.trf.xlu0
    %v104 = vpop.trf.xlu0
    %v105 = vpop.trf.xlu0
    %v106 = vpop.trf.xlu0
    %v107 = vpop.trf.xlu0
    %v108 = vpop.trf.xlu0
    %v109 = vpop.trf.xlu0
    %v110 = vpop.trf.xlu0
    %v111 = vpop.trf.xlu0
    %v112 = vpop.trf.xlu0
    %v113 = vpop.trf.xlu0
    %v114 = vpop.trf.xlu0
    %v115 = vpop.trf.xlu0
    %v116 = vpop.trf.xlu0
    %v117 = vpop.trf.xlu0
    %vm118 = vcmask 261120
    %v120 = vsel %vm118, %v102, 0
    %v123 = vsel %vm118, %v103, 0
    %v126 = vsel %vm118, %v104, 0
    %v129 = vsel %vm118, %v105, 0
    %v132 = vsel %vm118, %v106, 0
    %v135 = vsel %vm118, %v107, 0
    %v138 = vsel %vm118, %v108, 0
    %140 = vmatpush.msra.mxu0 0.0
    %141 = vmatpush.msra.mxu0 0.0
    %142 = vmatpush.msra.mxu0 0.0
    %143 = vmatpush.msra.mxu0 0.0
    %144 = vmatpush.msra.mxu0 0.0
    %145 = vmatpush.msra.mxu0 0.0
    %146 = vmatpush.msra.mxu0 0.0
    %147 = vmatpush.msra.mxu0 0.0
    %148 = vmatpush.msra.mxu0 0.0
    %149 = vmatpush.msra.mxu0 0.0
    %150 = vmatpush.msra.mxu0 0.0
    %151 = vmatpush.msra.mxu0 0.0
    %v152 = vand.u32 %v63, 4294901760
    %153 = vmatpush.msra.mxu0 %v152
    %v154 = vand.u32 %v62, 4294901760
    %155 = vmatpush.msra.mxu0 %v154
    %v156 = vand.u32 %v61, 4294901760
    %157 = vmatpush.msra.mxu0 %v156
    %v158 = vand.u32 %v60, 4294901760
    %159 = vmatpush.msra.mxu0 %v158
    %v160 = vand.u32 %v120, 4294901760
    %v161 = vsub.f32 %v120, %v160
    %v162 = vand.u32 %v161, 4294901760
    %v163 = vsub.f32 %v161, %v162
    %v164 = vand.u32 %v163, 4294901760
    %165 = vmatmul.f32.gmra.mxu0 %v164
    %v166 = vpop.f32.mrf.mxu0
    %v167 = vadd.f32 0.0, %v166
    %v168 = vand.u32 %v123, 4294901760
    %v169 = vsub.f32 %v123, %v168
    %v170 = vand.u32 %v169, 4294901760
    %v171 = vsub.f32 %v169, %v170
    %v172 = vand.u32 %v171, 4294901760
    %173 = vmatmul.f32.gmra.mxu0 %v172
    %v174 = vpop.f32.mrf.mxu0
    %v175 = vadd.f32 0.0, %v174
    %v176 = vand.u32 %v126, 4294901760
    %v177 = vsub.f32 %v126, %v176
    %v178 = vand.u32 %v177, 4294901760
    %v179 = vsub.f32 %v177, %v178
    %v180 = vand.u32 %v179, 4294901760
    %181 = vmatmul.f32.gmra.mxu0 %v180
    %v182 = vpop.f32.mrf.mxu0
    %v183 = vadd.f32 0.0, %v182
    %v184 = vand.u32 %v129, 4294901760
    %v185 = vsub.f32 %v129, %v184
    %v186 = vand.u32 %v185, 4294901760
    %v187 = vsub.f32 %v185, %v186
    %v188 = vand.u32 %v187, 4294901760
    %189 = vmatmul.f32.gmra.mxu0 %v188
    %v190 = vpop.f32.mrf.mxu0
    %v191 = vadd.f32 0.0, %v190
    %v192 = vand.u32 %v132, 4294901760
    %v193 = vsub.f32 %v132, %v192
    %v194 = vand.u32 %v193, 4294901760
    %v195 = vsub.f32 %v193, %v194
    %v196 = vand.u32 %v195, 4294901760
    %197 = vmatmul.f32.gmra.mxu0 %v196
    %v198 = vpop.f32.mrf.mxu0
    %v199 = vadd.f32 0.0, %v198
    %v200 = vand.u32 %v135, 4294901760
    %v201 = vsub.f32 %v135, %v200
    %v202 = vand.u32 %v201, 4294901760
    %v203 = vsub.f32 %v201, %v202
    %v204 = vand.u32 %v203, 4294901760
    %205 = vmatmul.f32.gmra.mxu0 %v204
    %v206 = vpop.f32.mrf.mxu0
    %v207 = vadd.f32 0.0, %v206
    %v208 = vand.u32 %v138, 4294901760
    %v209 = vsub.f32 %v138, %v208
    %v210 = vand.u32 %v209, 4294901760
    %v211 = vsub.f32 %v209, %v210
    %v212 = vand.u32 %v211, 4294901760
    %213 = vmatmul.f32.gmra.mxu0 %v212
    %v214 = vpop.f32.mrf.mxu0
    %v215 = vadd.f32 0.0, %v214
    %216 = vdwg.mxu0
    %217 = vmatpush.msra.mxu0 0.0
    %218 = vmatpush.msra.mxu0 0.0
    %219 = vmatpush.msra.mxu0 0.0
    %220 = vmatpush.msra.mxu0 0.0
    %221 = vmatpush.msra.mxu0 0.0
    %222 = vmatpush.msra.mxu0 0.0
    %223 = vmatpush.msra.mxu0 0.0
    %224 = vmatpush.msra.mxu0 0.0
    %225 = vmatpush.msra.mxu0 0.0
    %226 = vmatpush.msra.mxu0 0.0
    %227 = vmatpush.msra.mxu0 0.0
    %228 = vmatpush.msra.mxu0 0.0
    %v229 = vand.u32 %v63, 4294901760
    %v230 = vsub.f32 %v63, %v229
    %v231 = vand.u32 %v230, 4294901760
    %v232 = vsub.f32 %v230, %v231
    %v233 = vand.u32 %v232, 4294901760
    %234 = vmatpush.msra.mxu0 %v233
    %v235 = vand.u32 %v62, 4294901760
    %v236 = vsub.f32 %v62, %v235
    %v237 = vand.u32 %v236, 4294901760
    %v238 = vsub.f32 %v236, %v237
    %v239 = vand.u32 %v238, 4294901760
    %240 = vmatpush.msra.mxu0 %v239
    %v241 = vand.u32 %v61, 4294901760
    %v242 = vsub.f32 %v61, %v241
    %v243 = vand.u32 %v242, 4294901760
    %v244 = vsub.f32 %v242, %v243
    %v245 = vand.u32 %v244, 4294901760
    %246 = vmatpush.msra.mxu0 %v245
    %v247 = vand.u32 %v60, 4294901760
    %v248 = vsub.f32 %v60, %v247
    %v249 = vand.u32 %v248, 4294901760
    %v250 = vsub.f32 %v248, %v249
    %v251 = vand.u32 %v250, 4294901760
    %252 = vmatpush.msra.mxu0 %v251
    %v253 = vand.u32 %v120, 4294901760
    %254 = vmatmul.f32.gmra.mxu0 %v253
    %v255 = vpop.f32.mrf.mxu0
    %v256 = vadd.f32 %v167, %v255
    %v257 = vand.u32 %v123, 4294901760
    %258 = vmatmul.f32.gmra.mxu0 %v257
    %v259 = vpop.f32.mrf.mxu0
    %v260 = vadd.f32 %v175, %v259
    %v261 = vand.u32 %v126, 4294901760
    %262 = vmatmul.f32.gmra.mxu0 %v261
    %v263 = vpop.f32.mrf.mxu0
    %v264 = vadd.f32 %v183, %v263
    %v265 = vand.u32 %v129, 4294901760
    %266 = vmatmul.f32.gmra.mxu0 %v265
    %v267 = vpop.f32.mrf.mxu0
    %v268 = vadd.f32 %v191, %v267
    %v269 = vand.u32 %v132, 4294901760
    %270 = vmatmul.f32.gmra.mxu0 %v269
    %v271 = vpop.f32.mrf.mxu0
    %v272 = vadd.f32 %v199, %v271
    %v273 = vand.u32 %v135, 4294901760
    %274 = vmatmul.f32.gmra.mxu0 %v273
    %v275 = vpop.f32.mrf.mxu0
    %v276 = vadd.f32 %v207, %v275
    %v277 = vand.u32 %v138, 4294901760
    %278 = vmatmul.f32.gmra.mxu0 %v277
    %v279 = vpop.f32.mrf.mxu0
    %v280 = vadd.f32 %v215, %v279
    %281 = vdwg.mxu0
    %282 = vmatpush.msra.mxu0 0.0
    %283 = vmatpush.msra.mxu0 0.0
    %284 = vmatpush.msra.mxu0 0.0
    %285 = vmatpush.msra.mxu0 0.0
    %286 = vmatpush.msra.mxu0 0.0
    %287 = vmatpush.msra.mxu0 0.0
    %288 = vmatpush.msra.mxu0 0.0
    %289 = vmatpush.msra.mxu0 0.0
    %290 = vmatpush.msra.mxu0 0.0
    %291 = vmatpush.msra.mxu0 0.0
    %292 = vmatpush.msra.mxu0 0.0
    %293 = vmatpush.msra.mxu0 0.0
    %v294 = vand.u32 %v63, 4294901760
    %v295 = vsub.f32 %v63, %v294
    %296 = vmatpush.msra.mxu0 %v295
    %v297 = vand.u32 %v62, 4294901760
    %v298 = vsub.f32 %v62, %v297
    %299 = vmatpush.msra.mxu0 %v298
    %v300 = vand.u32 %v61, 4294901760
    %v301 = vsub.f32 %v61, %v300
    %302 = vmatpush.msra.mxu0 %v301
    %v303 = vand.u32 %v60, 4294901760
    %v304 = vsub.f32 %v60, %v303
    %305 = vmatpush.msra.mxu0 %v304
    %v306 = vand.u32 %v120, 4294901760
    %v307 = vsub.f32 %v120, %v306
    %308 = vmatmul.f32.gmra.mxu0 %v307
    %v309 = vpop.f32.mrf.mxu0
    %v310 = vadd.f32 %v256, %v309
    %v311 = vand.u32 %v123, 4294901760
    %v312 = vsub.f32 %v123, %v311
    %313 = vmatmul.f32.gmra.mxu0 %v312
    %v314 = vpop.f32.mrf.mxu0
    %v315 = vadd.f32 %v260, %v314
    %v316 = vand.u32 %v126, 4294901760
    %v317 = vsub.f32 %v126, %v316
    %318 = vmatmul.f32.gmra.mxu0 %v317
    %v319 = vpop.f32.mrf.mxu0
    %v320 = vadd.f32 %v264, %v319
    %v321 = vand.u32 %v129, 4294901760
    %v322 = vsub.f32 %v129, %v321
    %323 = vmatmul.f32.gmra.mxu0 %v322
    %v324 = vpop.f32.mrf.mxu0
    %v325 = vadd.f32 %v268, %v324
    %v326 = vand.u32 %v132, 4294901760
    %v327 = vsub.f32 %v132, %v326
    %328 = vmatmul.f32.gmra.mxu0 %v327
    %v329 = vpop.f32.mrf.mxu0
    %v330 = vadd.f32 %v272, %v329
    %v331 = vand.u32 %v135, 4294901760
    %v332 = vsub.f32 %v135, %v331
    %333 = vmatmul.f32.gmra.mxu0 %v332
    %v334 = vpop.f32.mrf.mxu0
    %v335 = vadd.f32 %v276, %v334
    %v336 = vand.u32 %v138, 4294901760
    %v337 = vsub.f32 %v138, %v336
    %338 = vmatmul.f32.gmra.mxu0 %v337
    %v339 = vpop.f32.mrf.mxu0
    %v340 = vadd.f32 %v280, %v339
    %341 = vdwg.mxu0
    %342 = vmatpush.msra.mxu0 0.0
    %343 = vmatpush.msra.mxu0 0.0
    %344 = vmatpush.msra.mxu0 0.0
    %345 = vmatpush.msra.mxu0 0.0
    %346 = vmatpush.msra.mxu0 0.0
    %347 = vmatpush.msra.mxu0 0.0
    %348 = vmatpush.msra.mxu0 0.0
    %349 = vmatpush.msra.mxu0 0.0
    %350 = vmatpush.msra.mxu0 0.0
    %351 = vmatpush.msra.mxu0 0.0
    %352 = vmatpush.msra.mxu0 0.0
    %353 = vmatpush.msra.mxu0 0.0
    %v354 = vand.u32 %v63, 4294901760
    %355 = vmatpush.msra.mxu0 %v354
    %v356 = vand.u32 %v62, 4294901760
    %357 = vmatpush.msra.mxu0 %v356
    %v358 = vand.u32 %v61, 4294901760
    %359 = vmatpush.msra.mxu0 %v358
    %v360 = vand.u32 %v60, 4294901760
    %361 = vmatpush.msra.mxu0 %v360
    %v362 = vand.u32 %v120, 4294901760
    %v363 = vsub.f32 %v120, %v362
    %v364 = vand.u32 %v363, 4294901760
    %365 = vmatmul.f32.gmra.mxu0 %v364
    %v366 = vpop.f32.mrf.mxu0
    %v367 = vadd.f32 %v310, %v366
    %v368 = vand.u32 %v123, 4294901760
    %v369 = vsub.f32 %v123, %v368
    %v370 = vand.u32 %v369, 4294901760
    %371 = vmatmul.f32.gmra.mxu0 %v370
    %v372 = vpop.f32.mrf.mxu0
    %v373 = vadd.f32 %v315, %v372
    %v374 = vand.u32 %v126, 4294901760
    %v375 = vsub.f32 %v126, %v374
    %v376 = vand.u32 %v375, 4294901760
    %377 = vmatmul.f32.gmra.mxu0 %v376
    %v378 = vpop.f32.mrf.mxu0
    %v379 = vadd.f32 %v320, %v378
    %v380 = vand.u32 %v129, 4294901760
    %v381 = vsub.f32 %v129, %v380
    %v382 = vand.u32 %v381, 4294901760
    %383 = vmatmul.f32.gmra.mxu0 %v382
    %v384 = vpop.f32.mrf.mxu0
    %v385 = vadd.f32 %v325, %v384
    %v386 = vand.u32 %v132, 4294901760
    %v387 = vsub.f32 %v132, %v386
    %v388 = vand.u32 %v387, 4294901760
    %389 = vmatmul.f32.gmra.mxu0 %v388
    %v390 = vpop.f32.mrf.mxu0
    %v391 = vadd.f32 %v330, %v390
    %v392 = vand.u32 %v135, 4294901760
    %v393 = vsub.f32 %v135, %v392
    %v394 = vand.u32 %v393, 4294901760
    %395 = vmatmul.f32.gmra.mxu0 %v394
    %v396 = vpop.f32.mrf.mxu0
    %v397 = vadd.f32 %v335, %v396
    %v398 = vand.u32 %v138, 4294901760
    %v399 = vsub.f32 %v138, %v398
    %v400 = vand.u32 %v399, 4294901760
    %401 = vmatmul.f32.gmra.mxu0 %v400
    %v402 = vpop.f32.mrf.mxu0
    %v403 = vadd.f32 %v340, %v402
    %404 = vdwg.mxu0
    %405 = vmatpush.msra.mxu0 0.0
    %406 = vmatpush.msra.mxu0 0.0
    %407 = vmatpush.msra.mxu0 0.0
    %408 = vmatpush.msra.mxu0 0.0
    %409 = vmatpush.msra.mxu0 0.0
    %410 = vmatpush.msra.mxu0 0.0
    %411 = vmatpush.msra.mxu0 0.0
    %412 = vmatpush.msra.mxu0 0.0
    %413 = vmatpush.msra.mxu0 0.0
    %414 = vmatpush.msra.mxu0 0.0
    %415 = vmatpush.msra.mxu0 0.0
    %416 = vmatpush.msra.mxu0 0.0
    %v417 = vand.u32 %v63, 4294901760
    %v418 = vsub.f32 %v63, %v417
    %v419 = vand.u32 %v418, 4294901760
    %420 = vmatpush.msra.mxu0 %v419
    %v421 = vand.u32 %v62, 4294901760
    %v422 = vsub.f32 %v62, %v421
    %v423 = vand.u32 %v422, 4294901760
    %424 = vmatpush.msra.mxu0 %v423
    %v425 = vand.u32 %v61, 4294901760
    %v426 = vsub.f32 %v61, %v425
    %v427 = vand.u32 %v426, 4294901760
    %428 = vmatpush.msra.mxu0 %v427
    %v429 = vand.u32 %v60, 4294901760
    %v430 = vsub.f32 %v60, %v429
    %v431 = vand.u32 %v430, 4294901760
    %432 = vmatpush.msra.mxu0 %v431
    %v433 = vand.u32 %v120, 4294901760
    %434 = vmatmul.f32.gmra.mxu0 %v433
    %v435 = vpop.f32.mrf.mxu0
    %v436 = vadd.f32 %v367, %v435
    %v437 = vand.u32 %v123, 4294901760
    %438 = vmatmul.f32.gmra.mxu0 %v437
    %v439 = vpop.f32.mrf.mxu0
    %v440 = vadd.f32 %v373, %v439
    %v441 = vand.u32 %v126, 4294901760
    %442 = vmatmul.f32.gmra.mxu0 %v441
    %v443 = vpop.f32.mrf.mxu0
    %v444 = vadd.f32 %v379, %v443
    %v445 = vand.u32 %v129, 4294901760
    %446 = vmatmul.f32.gmra.mxu0 %v445
    %v447 = vpop.f32.mrf.mxu0
    %v448 = vadd.f32 %v385, %v447
    %v449 = vand.u32 %v132, 4294901760
    %450 = vmatmul.f32.gmra.mxu0 %v449
    %v451 = vpop.f32.mrf.mxu0
    %v452 = vadd.f32 %v391, %v451
    %v453 = vand.u32 %v135, 4294901760
    %454 = vmatmul.f32.gmra.mxu0 %v453
    %v455 = vpop.f32.mrf.mxu0
    %v456 = vadd.f32 %v397, %v455
    %v457 = vand.u32 %v138, 4294901760
    %458 = vmatmul.f32.gmra.mxu0 %v457
    %v459 = vpop.f32.mrf.mxu0
    %v460 = vadd.f32 %v403, %v459
    %461 = vdwg.mxu0
    %462 = vmatpush.msra.mxu0 0.0
    %463 = vmatpush.msra.mxu0 0.0
    %464 = vmatpush.msra.mxu0 0.0
    %465 = vmatpush.msra.mxu0 0.0
    %466 = vmatpush.msra.mxu0 0.0
    %467 = vmatpush.msra.mxu0 0.0
    %468 = vmatpush.msra.mxu0 0.0
    %469 = vmatpush.msra.mxu0 0.0
    %470 = vmatpush.msra.mxu0 0.0
    %471 = vmatpush.msra.mxu0 0.0
    %472 = vmatpush.msra.mxu0 0.0
    %473 = vmatpush.msra.mxu0 0.0
    %v474 = vand.u32 %v63, 4294901760
    %475 = vmatpush.msra.mxu0 %v474
    %v476 = vand.u32 %v62, 4294901760
    %477 = vmatpush.msra.mxu0 %v476
    %v478 = vand.u32 %v61, 4294901760
    %479 = vmatpush.msra.mxu0 %v478
    %v480 = vand.u32 %v60, 4294901760
    %481 = vmatpush.msra.mxu0 %v480
    %v482 = vand.u32 %v120, 4294901760
    %483 = vmatmul.f32.gmra.mxu0 %v482
    %v484 = vpop.f32.mrf.mxu0
    %v485 = vadd.f32 %v436, %v484
    %v486 = vand.u32 %v123, 4294901760
    %487 = vmatmul.f32.gmra.mxu0 %v486
    %v488 = vpop.f32.mrf.mxu0
    %v489 = vadd.f32 %v440, %v488
    %v490 = vand.u32 %v126, 4294901760
    %491 = vmatmul.f32.gmra.mxu0 %v490
    %v492 = vpop.f32.mrf.mxu0
    %v493 = vadd.f32 %v444, %v492
    %v494 = vand.u32 %v129, 4294901760
    %495 = vmatmul.f32.gmra.mxu0 %v494
    %v496 = vpop.f32.mrf.mxu0
    %v497 = vadd.f32 %v448, %v496
    %v498 = vand.u32 %v132, 4294901760
    %499 = vmatmul.f32.gmra.mxu0 %v498
    %v500 = vpop.f32.mrf.mxu0
    %v501 = vadd.f32 %v452, %v500
    %v502 = vand.u32 %v135, 4294901760
    %503 = vmatmul.f32.gmra.mxu0 %v502
    %v504 = vpop.f32.mrf.mxu0
    %v505 = vadd.f32 %v456, %v504
    %v506 = vand.u32 %v138, 4294901760
    %507 = vmatmul.f32.gmra.mxu0 %v506
    %v508 = vpop.f32.mrf.mxu0
    %v509 = vadd.f32 %v460, %v508
    %510 = vdwg.mxu0
    %v511 = vadd.f32 %v75, %v485
    %v512 = vadd.f32 %v76, %v489
    %v513 = vadd.f32 %v77, %v493
    %v514 = vadd.f32 %v78, %v497
    %v515 = vadd.f32 %v79, %v501
    %v516 = vadd.f32 %v80, %v505
    %v517 = vadd.f32 %v81, %v509
    %518 = vst [vmem:[#allocation7] sm:$0xff] %v511
    %519 = vst [vmem:[#allocation7 + $0x8] sm:$0xff] %v512
    %520 = vst [vmem:[#allocation7 + $0x10] sm:$0xff] %v513
    %521 = vst [vmem:[#allocation7 + $0x18] sm:$0xff] %v514
    %522 = vst [vmem:[#allocation7 + $0x20] sm:$0xff] %v515
    %523 = vst [vmem:[#allocation7 + $0x28] sm:$0xff] %v516
    %524 = vst [vmem:[#allocation7 + $0x30] sm:$0xff] %v517
    // Predicated region
    $region22: #{tpu_custom_call.1} parent=1 // pred_check
      _
    $region23: #{tpu_custom_call.1} parent=1 // pred_check_branch
      %526 = sbr.rel (0) target = $region25
    $region24: #{tpu_custom_call.1} parent=1 // pred_region
      %528 = vsyncadd [#allocation4], 0
      %s529 = sshll.u32 [#allocation7], 4
      %s530 = int_to_ptr.vmem [resolvable:$true] %s529
      %s531 = sshll.u32 %s2, 4
      %s532 = int_to_ptr.hbm [resolvable:$true] %s531
      %537 = dma.vmem_to_hbm [thread:$0]  %s530, 896, %s532, [#allocation4], 128, 128, 8
    $region25: #{tpu_custom_call.1} parent=1 // pred_fallthru
      _
    // Predicated region
    $region26: #{tpu_custom_call.1} parent=1 // pred_check
      _
    $region27: #{tpu_custom_call.1} parent=1 // pred_check_branch
      %539 = sbr.rel (0) target = $region29
    $region28: #{tpu_custom_call.1} parent=1 // pred_region
      %541 = dma.done [#allocation4], 896
    $region29: #{tpu_custom_call.1} parent=1 // pred_fallthru
      _
    %542 = vsyncpa [#allocation3], 1
    %543 = vsyncpa [#allocation6], 1
    %544 = vsyncpa [#allocation4], 1

</llo_original>
